<compile_context>
chip_gen: v7x
topology: tpu7x:2x2x1
jax: 0.10.0
libtpu: 0.0.40
codegen_flags: <defaults>
</compile_context>

<pallas_src>
import functools

import jax
import jax.numpy as jnp
from jax.experimental import pallas as pl
from jax.experimental.pallas import tpu as pltpu

INPUT_DIM = 96
LAYER1 = 32
LAYER2 = 48
OUTPUT_DIM = 2
BN_EPS = 1e-5

# Padded widths used inside the kernel.
H_PAD = 128    # LAYER1 (32) / LAYER2 (48) padded to a full 128-lane vreg
OUT_PAD = 8    # OUTPUT_DIM (2) padded only to 8 lanes -> 32 B/row writeback


def _round_up(n, m):
    return (n + m - 1) // m * m


def _choose_tile(batch, block_m):
    """Batch-tile size: multiple of 16, capped at block_m, >=2 tiles when the
    batch is big enough to split across v7x's two TensorCores."""
    n_tiles = pl.cdiv(batch, block_m)
    if batch >= 32:
        n_tiles = max(n_tiles, 2)
    return min(block_m, _round_up(pl.cdiv(batch, n_tiles), 16))


def ann_kernel(x_ref, w1_ref, b1_ref, w2_ref, b2_ref, w3_ref, b3_ref, o_ref):
    """One batch tile: three back-to-back MXU matmuls + f32 VPU bias/ReLU.

    BatchNorm (eval) and Dropout (identity) are already folded into the
    weights by the wrapper; hidden lanes are zero-padded to 128 so no masking
    is needed, and the output tile is only 8 lanes wide to keep HBM writeback
    small.
    """
    x = x_ref[...]                                           # f32 (bm, 96)

    h1 = jnp.dot(x, w1_ref[...], preferred_element_type=jnp.float32)
    h1 = jnp.maximum(h1 + b1_ref[...], 0.0)                  # f32 (bm, 128)

    h2 = jnp.dot(h1, w2_ref[...], preferred_element_type=jnp.float32)
    h2 = jnp.maximum(h2 + b2_ref[...], 0.0)                  # f32 (bm, 128)

    out = jnp.dot(h2, w3_ref[...], preferred_element_type=jnp.float32)
    o_ref[...] = (out + b3_ref[...]).astype(o_ref.dtype)     # f32 (bm, 8)


def prepare_params(params):
    """Fold eval-mode BN into the following Linear; zero-pad feature dims.

    y_bn = relu(x@w1+b1)*s1 + t1   =>   relu(x@w1+b1) @ (s1.T*w2) + (t1@w2+b2)
    z_bn = relu(...)*s2 + t2       =>   relu(...)     @ (s2.T*w3) + (t2@w3+b3)
    """
    (w1, b1, s1, t1, w2, b2, s2, t2, w3, b3) = params

    w2f = s1.T * w2
    b2f = t1 @ w2 + b2
    w3f = s2.T * w3
    b3f = t2 @ w3 + b3

    def pad2(a, rows, cols):
        r, c = a.shape
        return jnp.pad(a, ((0, rows - r), (0, cols - c))).astype(jnp.float32)

    w1p = pad2(w1, INPUT_DIM, H_PAD)
    b1p = pad2(b1, 1, H_PAD)
    w2p = pad2(w2f, H_PAD, H_PAD)
    b2p = pad2(b2f, 1, H_PAD)
    w3p = pad2(w3f, H_PAD, OUT_PAD)
    b3p = pad2(b3f, 1, OUT_PAD)
    return (w1p, b1p, w2p, b2p, w3p, b3p)


@functools.partial(jax.jit, static_argnames=("block_m",))
def ann_forward(x, prepared_params, block_m=2048):
    w1, b1, w2, b2, w3, b3 = prepared_params

    B = x.shape[0]
    x = x.reshape(B, -1).astype(jnp.float32)   # == torch .view(batch_size, -1)
    assert x.shape[1] == INPUT_DIM

    bm = _choose_tile(B, block_m)
    grid = (pl.cdiv(B, bm),)                   # ragged last tile masked by Pallas

    def resident(shape):
        return pl.BlockSpec(shape, lambda i: (0, 0))

    out_padded = pl.pallas_call(
        ann_kernel,
        out_shape=jax.ShapeDtypeStruct((B, OUT_PAD), jnp.float32),
        grid=grid,
        in_specs=[
            pl.BlockSpec((bm, INPUT_DIM), lambda i: (i, 0)),   # streamed x tile
            resident((INPUT_DIM, H_PAD)),      # w1
            resident((1, H_PAD)),              # b1
            resident((H_PAD, H_PAD)),          # w2 (BN1 folded)
            resident((1, H_PAD)),              # b2
            resident((H_PAD, OUT_PAD)),        # w3 (BN2 folded)
            resident((1, OUT_PAD)),            # b3
        ],
        out_specs=pl.BlockSpec((bm, OUT_PAD), lambda i: (i, 0)),
        compiler_params=pltpu.CompilerParams(
            dimension_semantics=("parallel",)),
    )(x, w1, b1, w2, b2, w3, b3)

    return out_padded[:, :OUTPUT_DIM]


def init_params(key):
    """Deterministic parameter init mirroring the nn.Module shapes.

    Linear weights stored as (in, out); BatchNorm1d represented (eval mode) by
    scale = gamma / sqrt(running_var + eps), shift = beta - running_mean*scale.
    """
    ks = jax.random.split(key, 14)

    def linear(kw, kb, fan_in, fan_out):
        bound = 1.0 / jnp.sqrt(fan_in)
        w = jax.random.uniform(kw, (fan_in, fan_out), jnp.float32, -bound, bound)
        b = jax.random.uniform(kb, (1, fan_out), jnp.float32, -bound, bound)
        return w, b

    w1, b1 = linear(ks[0], ks[1], INPUT_DIM, LAYER1)
    w2, b2 = linear(ks[2], ks[3], LAYER1, LAYER2)
    w3, b3 = linear(ks[4], ks[5], LAYER2, OUTPUT_DIM)

    def bn(kg, kb, km, kv, dim):
        gamma = jax.random.uniform(kg, (1, dim), jnp.float32, 0.5, 1.5)
        beta = jax.random.uniform(kb, (1, dim), jnp.float32, -0.5, 0.5)
        rmean = jax.random.uniform(km, (1, dim), jnp.float32, -0.5, 0.5)
        rvar = jax.random.uniform(kv, (1, dim), jnp.float32, 0.5, 1.5)
        scale = gamma * jax.lax.rsqrt(rvar + BN_EPS)
        shift = beta - rmean * scale
        return scale, shift

    s1, t1 = bn(ks[6], ks[7], ks[8], ks[9], LAYER1)
    s2, t2 = bn(ks[10], ks[11], ks[12], ks[13], LAYER2)

    return (w1, b1, s1, t1, w2, b2, s2, t2, w3, b3)


def ann_reference(x, params):
    """Pure-JAX f32 reference of the same eval-mode forward pass."""
    (w1, b1, s1, t1, w2, b2, s2, t2, w3, b3) = params
    x = x.reshape(x.shape[0], -1)
    h1 = jnp.maximum(x @ w1 + b1, 0.0) * s1 + t1
    h2 = jnp.maximum(h1 @ w2 + b2, 0.0) * s2 + t2
    return h2 @ w3 + b3


if __name__ == "__main__":
    key = jax.random.PRNGKey(0)
    k_x, k_p = jax.random.split(key)

    B = 16
    x = jax.random.normal(k_x, (B, INPUT_DIM), dtype=jnp.float32)
    params = init_params(k_p)
    prepared = prepare_params(params)

    out = ann_forward(x, prepared)
    out = jax.block_until_ready(out)

    ref = ann_reference(x, params)
    assert out.shape == (B, OUTPUT_DIM)
    # f32 activations/weights; residual difference comes only from default
    # TPU matmul precision and the BN-fold rounding -> tight tolerance.
    err = float(jnp.max(jnp.abs(out - ref)))
    assert jnp.allclose(out, ref, atol=2e-2, rtol=2e-2), err

    print("KERNEL_OK")
</pallas_src>

<mosaic_0001>
module attributes {stable_mosaic.version = 11 : i64} {
  func.func @ann_kernel(%arg0: i32, %arg1: memref<16x96xf32, #tpu.memory_space<vmem>>, %arg2: memref<96x128xf32, #tpu.memory_space<vmem>>, %arg3: memref<1x128xf32, #tpu.memory_space<vmem>>, %arg4: memref<128x128xf32, #tpu.memory_space<vmem>>, %arg5: memref<1x128xf32, #tpu.memory_space<vmem>>, %arg6: memref<128x8xf32, #tpu.memory_space<vmem>>, %arg7: memref<1x8xf32, #tpu.memory_space<vmem>>, %arg8: memref<16x8xf32, #tpu.memory_space<vmem>>) attributes {dimension_semantics = [#tpu.dimension_semantics<parallel>], iteration_bounds = array<i64: 1>, scalar_prefetch = 0 : i64, scratch_operands = 0 : i64, tpu.core_type = #tpu.core_type<tc>, window_params = [{transform_indices = @transform_0, window_bounds = array<i64: 16, 96>}, {pipeline_mode = #tpu.pipeline_mode<synchronous>, transform_indices = @transform_1, window_bounds = array<i64: 96, 128>}, {pipeline_mode = #tpu.pipeline_mode<synchronous>, transform_indices = @transform_2, window_bounds = array<i64: 1, 128>}, {pipeline_mode = #tpu.pipeline_mode<synchronous>, transform_indices = @transform_3, window_bounds = array<i64: 128, 128>}, {pipeline_mode = #tpu.pipeline_mode<synchronous>, transform_indices = @transform_4, window_bounds = array<i64: 1, 128>}, {pipeline_mode = #tpu.pipeline_mode<synchronous>, transform_indices = @transform_5, window_bounds = array<i64: 128, 8>}, {pipeline_mode = #tpu.pipeline_mode<synchronous>, transform_indices = @transform_6, window_bounds = array<i64: 1, 8>}, {transform_indices = @transform_7, window_bounds = array<i64: 16, 8>}]} {
    %c0 = arith.constant 0 : index
    %c0_0 = arith.constant 0 : index
    %0 = vector.load %arg1[%c0, %c0_0] : memref<16x96xf32, #tpu.memory_space<vmem>>, vector<16x96xf32>
    %c0_1 = arith.constant 0 : index
    %c0_2 = arith.constant 0 : index
    %1 = vector.load %arg2[%c0_1, %c0_2] : memref<96x128xf32, #tpu.memory_space<vmem>>, vector<96x128xf32>
    %cst = arith.constant dense<0.000000e+00> : vector<16x128xf32>
    %2 = tpu.matmul %0, %1, %cst {dimension_numbers = #tpu.dot_dimension_numbers<[1], [0], [0], [1], [0, 0, 1, 1], [], []>} : vector<16x96xf32>, vector<96x128xf32>, vector<16x128xf32> -> vector<16x128xf32>
    %c0_3 = arith.constant 0 : index
    %c0_4 = arith.constant 0 : index
    %3 = vector.load %arg3[%c0_3, %c0_4] : memref<1x128xf32, #tpu.memory_space<vmem>>, vector<1x128xf32>
    %4 = vector.broadcast %3 : vector<1x128xf32> to vector<16x128xf32>
    %5 = arith.addf %2, %4 : vector<16x128xf32>
    %cst_5 = arith.constant 0.000000e+00 : f32
    %6 = vector.broadcast %cst_5 : f32 to vector<16x128xf32>
    %7 = arith.maximumf %5, %6 : vector<16x128xf32>
    %c0_6 = arith.constant 0 : index
    %c0_7 = arith.constant 0 : index
    %8 = vector.load %arg4[%c0_6, %c0_7] : memref<128x128xf32, #tpu.memory_space<vmem>>, vector<128x128xf32>
    %cst_8 = arith.constant dense<0.000000e+00> : vector<16x128xf32>
    %9 = tpu.matmul %7, %8, %cst_8 {dimension_numbers = #tpu.dot_dimension_numbers<[1], [0], [0], [1], [0, 0, 1, 1], [], []>} : vector<16x128xf32>, vector<128x128xf32>, vector<16x128xf32> -> vector<16x128xf32>
    %c0_9 = arith.constant 0 : index
    %c0_10 = arith.constant 0 : index
    %10 = vector.load %arg5[%c0_9, %c0_10] : memref<1x128xf32, #tpu.memory_space<vmem>>, vector<1x128xf32>
    %11 = vector.broadcast %10 : vector<1x128xf32> to vector<16x128xf32>
    %12 = arith.addf %9, %11 : vector<16x128xf32>
    %cst_11 = arith.constant 0.000000e+00 : f32
    %13 = vector.broadcast %cst_11 : f32 to vector<16x128xf32>
    %14 = arith.maximumf %12, %13 : vector<16x128xf32>
    %c0_12 = arith.constant 0 : index
    %c0_13 = arith.constant 0 : index
    %15 = vector.load %arg6[%c0_12, %c0_13] : memref<128x8xf32, #tpu.memory_space<vmem>>, vector<128x8xf32>
    %cst_14 = arith.constant dense<0.000000e+00> : vector<16x8xf32>
    %16 = tpu.matmul %14, %15, %cst_14 {dimension_numbers = #tpu.dot_dimension_numbers<[1], [0], [0], [1], [0, 0, 1, 1], [], []>} : vector<16x128xf32>, vector<128x8xf32>, vector<16x8xf32> -> vector<16x8xf32>
    %c0_15 = arith.constant 0 : index
    %c0_16 = arith.constant 0 : index
    %17 = vector.load %arg7[%c0_15, %c0_16] : memref<1x8xf32, #tpu.memory_space<vmem>>, vector<1x8xf32>
    %18 = vector.broadcast %17 : vector<1x8xf32> to vector<16x8xf32>
    %19 = arith.addf %16, %18 : vector<16x8xf32>
    %c0_17 = arith.constant 0 : index
    %c0_18 = arith.constant 0 : index
    %20 = vector.load %arg8[%c0_17, %c0_18] : memref<16x8xf32, #tpu.memory_space<vmem>>, vector<16x8xf32>
    tpu.vector_store %arg8[%c0_17, %c0_18], %19 {strides = array<i32>} : memref<16x8xf32, #tpu.memory_space<vmem>>, vector<16x8xf32>,
    return
  }
  func.func @transform_0(%arg0: i32) -> (i32, i32) {
    %c0_i32 = arith.constant 0 : i32
    %c0_i32_0 = arith.constant 0 : i32
    return %arg0, %c0_i32 : i32, i32
  }
  func.func @transform_1(%arg0: i32) -> (i32, i32) {
    %c0_i32 = arith.constant 0 : i32
    %c0_i32_0 = arith.constant 0 : i32
    %c0_i32_1 = arith.constant 0 : i32
    return %c0_i32, %c0_i32_0 : i32, i32
  }
  func.func @transform_2(%arg0: i32) -> (i32, i32) {
    %c0_i32 = arith.constant 0 : i32
    %c0_i32_0 = arith.constant 0 : i32
    %c0_i32_1 = arith.constant 0 : i32
    return %c0_i32, %c0_i32_0 : i32, i32
  }
  func.func @transform_3(%arg0: i32) -> (i32, i32) {
    %c0_i32 = arith.constant 0 : i32
    %c0_i32_0 = arith.constant 0 : i32
    %c0_i32_1 = arith.constant 0 : i32
    return %c0_i32, %c0_i32_0 : i32, i32
  }
  func.func @transform_4(%arg0: i32) -> (i32, i32) {
    %c0_i32 = arith.constant 0 : i32
    %c0_i32_0 = arith.constant 0 : i32
    %c0_i32_1 = arith.constant 0 : i32
    return %c0_i32, %c0_i32_0 : i32, i32
  }
  func.func @transform_5(%arg0: i32) -> (i32, i32) {
    %c0_i32 = arith.constant 0 : i32
    %c0_i32_0 = arith.constant 0 : i32
    %c0_i32_1 = arith.constant 0 : i32
    return %c0_i32, %c0_i32_0 : i32, i32
  }
  func.func @transform_6(%arg0: i32) -> (i32, i32) {
    %c0_i32 = arith.constant 0 : i32
    %c0_i32_0 = arith.constant 0 : i32
    %c0_i32_1 = arith.constant 0 : i32
    return %c0_i32, %c0_i32_0 : i32, i32
  }
  func.func @transform_7(%arg0: i32) -> (i32, i32) {
    %c0_i32 = arith.constant 0 : i32
    %c0_i32_0 = arith.constant 0 : i32
    return %arg0, %c0_i32 : i32, i32
  }
}

</mosaic_0001>

<llo_original>
// kernel: ann_forward.1
$region0: #{ann_forward.1}
  #allocation0 [shape = 'u32[]', space=smem, size = 0x4, offset = 0x4, fixed_abs, tag = 'smem constant byte address 0x4 - core index']
  #allocation1 [shape = 'u32[144,128]{1,0:T(1,128)}', space=vmem, size = 0x12000, scoped, tag = 'internal scratch']
  %s0 = inlined_call_operand.vmem [shape: f32[16,96], index: 0, kind: input, shape index: {}]
  %s1 = inlined_call_operand.hbm [shape: f32[96,128], index: 1, kind: input, shape index: {}]
  %s2 = inlined_call_operand.vmem [shape: f32[1,128], index: 2, kind: input, shape index: {}]
  %s3 = inlined_call_operand.vmem [shape: f32[128,128], index: 3, kind: input, shape index: {}]
  %s4 = inlined_call_operand.vmem [shape: f32[1,128], index: 4, kind: input, shape index: {}]
  %s5 = inlined_call_operand.vmem [shape: f32[128,8], index: 5, kind: input, shape index: {}]
  %s6 = inlined_call_operand.vmem [shape: f32[1,8], index: 6, kind: input, shape index: {}]
  %s7 = inlined_call_operand.vmem [shape: f32[16,8], index: 7, kind: output, shape index: {}]
  %s8 = sld [smem:[#allocation0]]
  $region42: #{ann_forward.1} parent=0
    _
  %s10 = ssub.s32 1, %s8
  %s11 = scalar_select 0, %s10, %s8
  $region1: #{ann_forward.1} parent=0
    #allocation2 [shape = 'u8[49152]{0}', space=vmem, size = 0xc000, scoped, tag = 'input window, operand 1, single buffered']
    #allocation3 [shape = 's32[1]{0}', space=sflag, size = 0x4, scoped, tag = 'scoped memory for ann_forward.1']
    %12 = vsyncpa [#allocation3], 0
    // Predicated region
    $region2: #{ann_forward.1} parent=1 // pred_check
      _
    $region3: #{ann_forward.1} parent=1 // pred_check_branch
      %14 = sbr.rel (0) target = $region5
    $region4: #{ann_forward.1} parent=1 // pred_region
      _
    $region5: #{ann_forward.1} parent=1 // pred_fallthru
      _
    // Predicated region
    $region6: #{ann_forward.1} parent=1 // pred_check
      _
    $region7: #{ann_forward.1} parent=1 // pred_check_branch
      %16 = sbr.rel (0) target = $region9
    $region8: #{ann_forward.1} parent=1 // pred_region
      %s18 = ssub.s32 1536, 1536
      %19 = vsyncadd [#allocation3], %s18
      %s20 = sshll.u32 [#allocation2], 4
      %s21 = int_to_ptr.vmem [resolvable:$true] %s20
      %26 = dma.hbm_to_vmem [thread:$0]  %s1, 1536, %s21, [#allocation3], 128, 128, 8
    $region9: #{ann_forward.1} parent=1 // pred_fallthru
      _
    // Predicated region
    $region10: #{ann_forward.1} parent=1 // pred_check
      _
    $region11: #{ann_forward.1} parent=1 // pred_check_branch
      %28 = sbr.rel (0) target = $region13
    $region12: #{ann_forward.1} parent=1 // pred_region
      _
    $region13: #{ann_forward.1} parent=1 // pred_fallthru
      _
    // Predicated region
    $region14: #{ann_forward.1} parent=1 // pred_check
      _
    $region15: #{ann_forward.1} parent=1 // pred_check_branch
      %30 = sbr.rel (0) target = $region17
    $region16: #{ann_forward.1} parent=1 // pred_region
      _
    $region17: #{ann_forward.1} parent=1 // pred_fallthru
      _
    // Predicated region
    $region18: #{ann_forward.1} parent=1 // pred_check
      _
    $region19: #{ann_forward.1} parent=1 // pred_check_branch
      %32 = sbr.rel (0) target = $region21
    $region20: #{ann_forward.1} parent=1 // pred_region
      _
    $region21: #{ann_forward.1} parent=1 // pred_fallthru
      _
    // Predicated region
    $region22: #{ann_forward.1} parent=1 // pred_check
      _
    $region23: #{ann_forward.1} parent=1 // pred_check_branch
      %34 = sbr.rel (0) target = $region25
    $region24: #{ann_forward.1} parent=1 // pred_region
      _
    $region25: #{ann_forward.1} parent=1 // pred_fallthru
      _
    // Predicated region
    $region26: #{ann_forward.1} parent=1 // pred_check
      _
    $region27: #{ann_forward.1} parent=1 // pred_check_branch
      %36 = sbr.rel (0) target = $region29
    $region28: #{ann_forward.1} parent=1 // pred_region
      _
    $region29: #{ann_forward.1} parent=1 // pred_fallthru
      _
    // Predicated region
    $region30: #{ann_forward.1} parent=1 // pred_check
      _
    $region31: #{ann_forward.1} parent=1 // pred_check_branch
      %38 = sbr.rel (0) target = $region33
    $region32: #{ann_forward.1} parent=1 // pred_region
      %39 = dma.done [#allocation3], 1536
    $region33: #{ann_forward.1} parent=1 // pred_fallthru
      _
    %v40 = vld [vmem:[%s0] sm:$0xff]
    %v41 = vld [vmem:[%s0 + $0x8] sm:$0xff]
    %v42 = vld [vmem:[#allocation2] sm:$0xff]
    %v43 = vld [vmem:[#allocation2 + $0x8] sm:$0xff]
    %v44 = vld [vmem:[#allocation2 + $0x10] sm:$0xff]
    %v45 = vld [vmem:[#allocation2 + $0x18] sm:$0xff]
    %v46 = vld [vmem:[#allocation2 + $0x20] sm:$0xff]
    %v47 = vld [vmem:[#allocation2 + $0x28] sm:$0xff]
    %v48 = vld [vmem:[#allocation2 + $0x30] sm:$0xff]
    %v49 = vld [vmem:[#allocation2 + $0x38] sm:$0xff]
    %v50 = vld [vmem:[#allocation2 + $0x40] sm:$0xff]
    %v51 = vld [vmem:[#allocation2 + $0x48] sm:$0xff]
    %v52 = vld [vmem:[#allocation2 + $0x50] sm:$0xff]
    %v53 = vld [vmem:[#allocation2 + $0x58] sm:$0xff]
    %v54 = vld [vmem:[%s2] sm:$0x1]
    %v56 = vlaneseq
    %v57 = vshrl.u32 %v56, 7
    %v58 = vsub.s32 0, %v57
    %v59 = vrot.slane %v54, %v58
    %vm61 = vcmask 785408
    %v63 = vsel %vm61, %v40, 0
    %v66 = vsel %vm61, %v41, 0
    %68 = vmatprep.subr.mxu0 0.0
    %69 = vmatpush1.msra.mxu0 %v42
    %70 = vmatprep.subr.mxu0 0.0
    %71 = vmatpush1.msra.mxu0 %v43
    %72 = vmatprep.subr.mxu0 0.0
    %73 = vmatpush1.msra.mxu0 %v44
    %74 = vmatprep.subr.mxu0 0.0
    %75 = vmatpush1.msra.mxu0 %v45
    %76 = vmatprep.subr.mxu0 0.0
    %77 = vmatpush1.msra.mxu0 %v46
    %78 = vmatprep.subr.mxu0 0.0
    %79 = vmatpush1.msra.mxu0 %v47
    %80 = vmatprep.subr.mxu0 0.0
    %81 = vmatpush1.msra.mxu0 %v48
    %82 = vmatprep.subr.mxu0 0.0
    %83 = vmatpush1.msra.mxu0 %v49
    %84 = vmatprep.subr.mxu0 0.0
    %85 = vmatpush1.msra.mxu0 %v50
    %86 = vmatprep.subr.mxu0 0.0
    %87 = vmatpush1.msra.mxu0 %v51
    %88 = vmatprep.subr.mxu0 0.0
    %89 = vmatpush1.msra.mxu0 %v52
    %90 = vmatprep.subr.mxu0 0.0
    %91 = vmatpush1.msra.mxu0 %v53
    %92 = vmatprep.subr.mxu0 0.0
    %93 = vmatpush1.msra.mxu0 0.0
    %94 = vmatprep.subr.mxu0 0.0
    %95 = vmatpush1.msra.mxu0 0.0
    %96 = vmatprep.subr.mxu0 0.0
    %97 = vmatpush1.msra.mxu0 0.0
    %98 = vmatprep.subr.mxu0 0.0
    %99 = vmatpush1.msra.mxu0 0.0
    %100 = vmatprep.subr.mxu0 0.0
    %101 = vmatpush1.msra.mxu0 0.0
    %102 = vmatprep.subr.mxu0 0.0
    %103 = vmatpush1.msra.mxu0 0.0
    %104 = vmatprep.subr.mxu0 0.0
    %105 = vmatpush1.msra.mxu0 0.0
    %106 = vmatprep.subr.mxu0 0.0
    %107 = vmatpush1.msra.mxu0 0.0
    %108 = vmatprep.subr.mxu0 0.0
    %109 = vmatpush1.msra.mxu0 0.0
    %110 = vmatprep.subr.mxu0 0.0
    %111 = vmatpush1.msra.mxu0 0.0
    %112 = vmatprep.subr.mxu0 0.0
    %113 = vmatpush1.msra.mxu0 0.0
    %114 = vmatprep.subr.mxu0 0.0
    %115 = vmatpush1.msra.mxu0 0.0
    %116 = vmatprep.subr.mxu0 0.0
    %117 = vmatpush1.msra.mxu0 0.0
    %118 = vmatprep.subr.mxu0 0.0
    %119 = vmatpush1.msra.mxu0 0.0
    %120 = vmatprep.subr.mxu0 0.0
    %121 = vmatpush1.msra.mxu0 0.0
    %122 = vmatprep.subr.mxu0 0.0
    %123 = vmatpush1.msra.mxu0 0.0
    %124 = vmatprep.subr.mxu0 0.0
    %125 = vmatpush1.msra.mxu0 0.0
    %126 = vmatprep.subr.mxu0 0.0
    %127 = vmatpush1.msra.mxu0 0.0
    %128 = vmatprep.subr.mxu0 0.0
    %129 = vmatpush1.msra.mxu0 0.0
    %130 = vmatprep.subr.mxu0 0.0
    %131 = vmatpush1.msra.mxu0 0.0
    %132 = vmatprep.mubr.f32.mxu0 0.0
    %133 = vmatmul.mubr.f32.gmra.mrb[0].mxu0 %v63
    %v134 = vpop.f32.mrb[0].mxu0
    %v135 = vadd.f32 %v59, %v134
    %v136 = vpop.f32.mrb[0].mxu0
    %137 = vmatprep.mubr.f32.mxu0 0.0
    %138 = vmatmul.mubr.f32.gmra.mrb[0].mxu0 %v66
    %v139 = vpop.f32.mrb[0].mxu0
    %v140 = vadd.f32 %v59, %v139
    %v141 = vpop.f32.mrb[0].mxu0
    %142 = vdwg.mxu0
    %v143 = vmax.f32 %v135, 0.0
    %v144 = vmax.f32 %v140, 0.0
    %v145 = vld [vmem:[%s3] sm:$0xff]
    %v146 = vld [vmem:[%s3 + $0x8] sm:$0xff]
    %v147 = vld [vmem:[%s3 + $0x10] sm:$0xff]
    %v148 = vld [vmem:[%s3 + $0x18] sm:$0xff]
    %v149 = vld [vmem:[%s3 + $0x20] sm:$0xff]
    %v150 = vld [vmem:[%s3 + $0x28] sm:$0xff]
    %v151 = vld [vmem:[%s3 + $0x30] sm:$0xff]
    %v152 = vld [vmem:[%s3 + $0x38] sm:$0xff]
    %v153 = vld [vmem:[%s3 + $0x40] sm:$0xff]
    %v154 = vld [vmem:[%s3 + $0x48] sm:$0xff]
    %v155 = vld [vmem:[%s3 + $0x50] sm:$0xff]
    %v156 = vld [vmem:[%s3 + $0x58] sm:$0xff]
    %v157 = vld [vmem:[%s3 + $0x60] sm:$0xff]
    %v158 = vld [vmem:[%s3 + $0x68] sm:$0xff]
    %v159 = vld [vmem:[%s3 + $0x70] sm:$0xff]
    %v160 = vld [vmem:[%s3 + $0x78] sm:$0xff]
    %v161 = vld [vmem:[%s4] sm:$0x1]
    %v163 = vlaneseq
    %v164 = vshrl.u32 %v163, 7
    %v165 = vsub.s32 0, %v164
    %v166 = vrot.slane %v161, %v165
    %168 = vmatprep.subr.mxu0 0.0
    %169 = vmatpush1.msra.mxu0 %v145
    %170 = vmatprep.subr.mxu0 0.0
    %171 = vmatpush1.msra.mxu0 %v146
    %172 = vmatprep.subr.mxu0 0.0
    %173 = vmatpush1.msra.mxu0 %v147
    %174 = vmatprep.subr.mxu0 0.0
    %175 = vmatpush1.msra.mxu0 %v148
    %176 = vmatprep.subr.mxu0 0.0
    %177 = vmatpush1.msra.mxu0 %v149
    %178 = vmatprep.subr.mxu0 0.0
    %179 = vmatpush1.msra.mxu0 %v150
    %180 = vmatprep.subr.mxu0 0.0
    %181 = vmatpush1.msra.mxu0 %v151
    %182 = vmatprep.subr.mxu0 0.0
    %183 = vmatpush1.msra.mxu0 %v152
    %184 = vmatprep.subr.mxu0 0.0
    %185 = vmatpush1.msra.mxu0 %v153
    %186 = vmatprep.subr.mxu0 0.0
    %187 = vmatpush1.msra.mxu0 %v154
    %188 = vmatprep.subr.mxu0 0.0
    %189 = vmatpush1.msra.mxu0 %v155
    %190 = vmatprep.subr.mxu0 0.0
    %191 = vmatpush1.msra.mxu0 %v156
    %192 = vmatprep.subr.mxu0 0.0
    %193 = vmatpush1.msra.mxu0 %v157
    %194 = vmatprep.subr.mxu0 0.0
    %195 = vmatpush1.msra.mxu0 %v158
    %196 = vmatprep.subr.mxu0 0.0
    %197 = vmatpush1.msra.mxu0 %v159
    %198 = vmatprep.subr.mxu0 0.0
    %199 = vmatpush1.msra.mxu0 %v160
    %200 = vmatprep.subr.mxu0 0.0
    %201 = vmatpush1.msra.mxu0 0.0
    %202 = vmatprep.subr.mxu0 0.0
    %203 = vmatpush1.msra.mxu0 0.0
    %204 = vmatprep.subr.mxu0 0.0
    %205 = vmatpush1.msra.mxu0 0.0
    %206 = vmatprep.subr.mxu0 0.0
    %207 = vmatpush1.msra.mxu0 0.0
    %208 = vmatprep.subr.mxu0 0.0
    %209 = vmatpush1.msra.mxu0 0.0
    %210 = vmatprep.subr.mxu0 0.0
    %211 = vmatpush1.msra.mxu0 0.0
    %212 = vmatprep.subr.mxu0 0.0
    %213 = vmatpush1.msra.mxu0 0.0
    %214 = vmatprep.subr.mxu0 0.0
    %215 = vmatpush1.msra.mxu0 0.0
    %216 = vmatprep.subr.mxu0 0.0
    %217 = vmatpush1.msra.mxu0 0.0
    %218 = vmatprep.subr.mxu0 0.0
    %219 = vmatpush1.msra.mxu0 0.0
    %220 = vmatprep.subr.mxu0 0.0
    %221 = vmatpush1.msra.mxu0 0.0
    %222 = vmatprep.subr.mxu0 0.0
    %223 = vmatpush1.msra.mxu0 0.0
    %224 = vmatprep.subr.mxu0 0.0
    %225 = vmatpush1.msra.mxu0 0.0
    %226 = vmatprep.subr.mxu0 0.0
    %227 = vmatpush1.msra.mxu0 0.0
    %228 = vmatprep.subr.mxu0 0.0
    %229 = vmatpush1.msra.mxu0 0.0
    %230 = vmatprep.subr.mxu0 0.0
    %231 = vmatpush1.msra.mxu0 0.0
    %232 = vmatprep.mubr.f32.mxu0 0.0
    %233 = vmatmul.mubr.f32.gmra.mrb[0].mxu0 %v143
    %v234 = vpop.f32.mrb[0].mxu0
    %v235 = vadd.f32 %v166, %v234
    %v236 = vpop.f32.mrb[0].mxu0
    %237 = vmatprep.mubr.f32.mxu0 0.0
    %238 = vmatmul.mubr.f32.gmra.mrb[0].mxu0 %v144
    %v239 = vpop.f32.mrb[0].mxu0
    %v240 = vadd.f32 %v166, %v239
    %v241 = vpop.f32.mrb[0].mxu0
    %242 = vdwg.mxu0
    %v243 = vmax.f32 %v235, 0.0
    %v244 = vmax.f32 %v240, 0.0
    %v245 = vld [vmem:[%s5] sm:$0xff]
    %v246 = vld [vmem:[%s5 + $0x8] sm:$0xff]
    %v247 = vld [vmem:[%s5 + $0x10] sm:$0xff]
    %v248 = vld [vmem:[%s5 + $0x18] sm:$0xff]
    %v249 = vld [vmem:[%s5 + $0x20] sm:$0xff]
    %v250 = vld [vmem:[%s5 + $0x28] sm:$0xff]
    %v251 = vld [vmem:[%s5 + $0x30] sm:$0xff]
    %v252 = vld [vmem:[%s5 + $0x38] sm:$0xff]
    %v253 = vld [vmem:[%s5 + $0x40] sm:$0xff]
    %v254 = vld [vmem:[%s5 + $0x48] sm:$0xff]
    %v255 = vld [vmem:[%s5 + $0x50] sm:$0xff]
    %v256 = vld [vmem:[%s5 + $0x58] sm:$0xff]
    %v257 = vld [vmem:[%s5 + $0x60] sm:$0xff]
    %v258 = vld [vmem:[%s5 + $0x68] sm:$0xff]
    %v259 = vld [vmem:[%s5 + $0x70] sm:$0xff]
    %v260 = vld [vmem:[%s5 + $0x78] sm:$0xff]
    %v261 = vld [vmem:[%s6] sm:$0x1]
    %v263 = vlaneseq
    %v264 = vshrl.u32 %v263, 7
    %v265 = vsub.s32 0, %v264
    %v266 = vrot.slane %v261, %v265
    %268 = vmatprep.subr.mxu0 0.0
    %269 = vmatpush1.msra.mxu0 %v245
    %270 = vmatprep.subr.mxu0 0.0
    %271 = vmatpush1.msra.mxu0 %v246
    %272 = vmatprep.subr.mxu0 0.0
    %273 = vmatpush1.msra.mxu0 %v247
    %274 = vmatprep.subr.mxu0 0.0
    %275 = vmatpush1.msra.mxu0 %v248
    %276 = vmatprep.subr.mxu0 0.0
    %277 = vmatpush1.msra.mxu0 %v249
    %278 = vmatprep.subr.mxu0 0.0
    %279 = vmatpush1.msra.mxu0 %v250
    %280 = vmatprep.subr.mxu0 0.0
    %281 = vmatpush1.msra.mxu0 %v251
    %282 = vmatprep.subr.mxu0 0.0
    %283 = vmatpush1.msra.mxu0 %v252
    %284 = vmatprep.subr.mxu0 0.0
    %285 = vmatpush1.msra.mxu0 %v253
    %286 = vmatprep.subr.mxu0 0.0
    %287 = vmatpush1.msra.mxu0 %v254
    %288 = vmatprep.subr.mxu0 0.0
    %289 = vmatpush1.msra.mxu0 %v255
    %290 = vmatprep.subr.mxu0 0.0
    %291 = vmatpush1.msra.mxu0 %v256
    %292 = vmatprep.subr.mxu0 0.0
    %293 = vmatpush1.msra.mxu0 %v257
    %294 = vmatprep.subr.mxu0 0.0
    %295 = vmatpush1.msra.mxu0 %v258
    %296 = vmatprep.subr.mxu0 0.0
    %297 = vmatpush1.msra.mxu0 %v259
    %298 = vmatprep.subr.mxu0 0.0
    %299 = vmatpush1.msra.mxu0 %v260
    %300 = vmatprep.subr.mxu0 0.0
    %301 = vmatpush1.msra.mxu0 0.0
    %302 = vmatprep.subr.mxu0 0.0
    %303 = vmatpush1.msra.mxu0 0.0
    %304 = vmatprep.subr.mxu0 0.0
    %305 = vmatpush1.msra.mxu0 0.0
    %306 = vmatprep.subr.mxu0 0.0
    %307 = vmatpush1.msra.mxu0 0.0
    %308 = vmatprep.subr.mxu0 0.0
    %309 = vmatpush1.msra.mxu0 0.0
    %310 = vmatprep.subr.mxu0 0.0
    %311 = vmatpush1.msra.mxu0 0.0
    %312 = vmatprep.subr.mxu0 0.0
    %313 = vmatpush1.msra.mxu0 0.0
    %314 = vmatprep.subr.mxu0 0.0
    %315 = vmatpush1.msra.mxu0 0.0
    %316 = vmatprep.subr.mxu0 0.0
    %317 = vmatpush1.msra.mxu0 0.0
    %318 = vmatprep.subr.mxu0 0.0
    %319 = vmatpush1.msra.mxu0 0.0
    %320 = vmatprep.subr.mxu0 0.0
    %321 = vmatpush1.msra.mxu0 0.0
    %322 = vmatprep.subr.mxu0 0.0
    %323 = vmatpush1.msra.mxu0 0.0
    %324 = vmatprep.subr.mxu0 0.0
    %325 = vmatpush1.msra.mxu0 0.0
    %326 = vmatprep.subr.mxu0 0.0
    %327 = vmatpush1.msra.mxu0 0.0
    %328 = vmatprep.subr.mxu0 0.0
    %329 = vmatpush1.msra.mxu0 0.0
    %330 = vmatprep.subr.mxu0 0.0
    %331 = vmatpush1.msra.mxu0 0.0
    %332 = vmatprep.mubr.f32.mxu0 0.0
    %333 = vmatmul.mubr.f32.gmra.mrb[0].mxu0 %v243
    %v334 = vpop.f32.mrb[0].mxu0
    %v335 = vadd.f32 %v266, %v334
    %v336 = vpop.f32.mrb[0].mxu0
    %337 = vmatprep.mubr.f32.mxu0 0.0
    %338 = vmatmul.mubr.f32.gmra.mrb[0].mxu0 %v244
    %v339 = vpop.f32.mrb[0].mxu0
    %v340 = vadd.f32 %v266, %v339
    %v341 = vpop.f32.mrb[0].mxu0
    %342 = vdwg.mxu0
    %vm343 = vcmask 64512
    %344 = vst.msk [vmem:[%s7] sm:$0xff] %vm343, %v335
    %345 = vst.msk [vmem:[%s7 + $0x8] sm:$0xff] %vm343, %v340
    // Predicated region
    $region34: #{ann_forward.1} parent=1 // pred_check
      _
    $region35: #{ann_forward.1} parent=1 // pred_check_branch
      %347 = sbr.rel (0) target = $region37
    $region36: #{ann_forward.1} parent=1 // pred_region
      _
    $region37: #{ann_forward.1} parent=1 // pred_fallthru
      _
    // Predicated region
    $region38: #{ann_forward.1} parent=1 // pred_check
      _
    $region39: #{ann_forward.1} parent=1 // pred_check_branch
      %349 = sbr.rel (0) target = $region41
    $region40: #{ann_forward.1} parent=1 // pred_region
      _
    $region41: #{ann_forward.1} parent=1 // pred_fallthru
      _
    %350 = vsyncpa [#allocation3], 1

</llo_original>
